<compile_context>
chip_gen: v7x
topology: tpu7x:2x2x1
jax: 0.10.0
libtpu: 0.0.40
codegen_flags: <defaults>
</compile_context>

<pallas_src>
import jax
import jax.numpy as jnp
from jax.experimental import pallas as pl
from jax.experimental.pallas import tpu as pltpu


def transition_kernel(x_ref, w_ref, pool_ref, scale_ref, shift_ref, o_ref):
    # x_ref:     (1, Cin, S)   flattened-spatial tile, S = TR * 2W, bf16
    # w_ref:     (Cout, Cin)   1x1 conv weight, bf16
    # pool_ref:  (2W, WP)      per-row-pair 2x2 avg-pool matrix (0.25 entries), bf16
    # scale_ref: (Cout, 1)     folded eval-mode BatchNorm scale, f32
    # shift_ref: (Cout, 1)     folded eval-mode BatchNorm shift, f32
    # o_ref:     (1, Cout, P)  pooled output tile, P = TR * WP
    tw = pool_ref.shape[0]              # 2*W  (one row pair, flattened)
    s = x_ref.shape[2]
    tr = s // tw                        # row-pair groups in this tile (static)

    # 1x1 conv (bf16 x bf16 -> f32 on the MXU) + ReLU, lane-dense spatial axis.
    y = jnp.dot(w_ref[...], x_ref[0], preferred_element_type=jnp.float32)   # (Cout, S)
    y = jnp.maximum(y, 0.0).astype(jnp.bfloat16)

    # 2x2 average pool: each row-pair group of 2W consecutive flat positions
    # [row 2t | row 2t+1] needs only a tiny (2W, WP) bf16 matmul that folds the
    # row-pair sum and the width pool (0.25 weights) — no dense (S, P) matrix.
    pool_mat = pool_ref[...]
    parts = [
        jnp.dot(y[:, t * tw:(t + 1) * tw], pool_mat,
                preferred_element_type=jnp.float32)                          # (Cout, WP)
        for t in range(tr)
    ]
    pooled = parts[0] if tr == 1 else jnp.concatenate(parts, axis=-1)        # (Cout, P)

    # Eval-mode BatchNorm affine applied post-pool (exact: pool weights sum to 1).
    o_ref[0] = (pooled * scale_ref[...] + shift_ref[...]).astype(o_ref.dtype)


def _vmem_capacity_bytes(default_bytes=64 * 1024 * 1024):
    """Physical VMEM per TensorCore; conservative (v7x-sized) fallback."""
    try:
        cap = getattr(pltpu.get_tpu_info(), "vmem_capacity_bytes", None)
        if cap:
            return int(cap)
    except Exception:
        pass
    return default_bytes


def _choose_row_pairs(N, Cin, Cout, H, W, budget_bytes):
    """Pick TR (row-pairs per grid step).

    Legality: TR == HP (whole image) or (HP % TR == 0 and (TR*WP) % 128 == 0),
    so every BlockSpec stays (8,128)-legal and the output block is lane-dense.
    The footprint covers the full per-step working set.
    """
    HP, WP, TW = H // 2, W // 2, 2 * W

    def legal(tr):
        return tr == HP or (HP % tr == 0 and (tr * WP) % 128 == 0)

    def footprint(tr):
        s, p = tr * TW, tr * WP
        x_blk = 2 * (Cin * s * 2)                 # bf16 input tile, double-buffered
        out_blk = 2 * (Cout * p * 4)              # f32 output tile, double-buffered
        y_tmp = Cout * s * 4 + Cout * s * 2       # f32 conv output + bf16 copy
        pooled = 2 * (Cout * p * 4)               # pooled tile + slack
        consts = 2 * (Cout * Cin * 2 + TW * WP * 2 + 2 * Cout * 4)  # w/pool/scale/shift x2 bufs
        return x_blk + out_blk + y_tmp + pooled + consts

    legal_trs = [tr for tr in range(1, HP + 1) if legal(tr)]
    fitting = [tr for tr in legal_trs if footprint(tr) <= budget_bytes]
    if not fitting:
        # Nothing fits the budget: take the SMALLEST legal tile (never the largest).
        return min(legal_trs, key=footprint)
    tr = max(fitting)
    # Keep >= 2 total grid steps so both v7x TensorCores get work when possible.
    if N * (HP // tr) < 2:
        splittable = [t for t in fitting if N * (HP // t) >= 2]
        if splittable:
            tr = max(splittable)
    return tr


def transition_layer(x_nchw, conv_w, gamma, beta, running_mean, running_var, eps=1e-5):
    N, Cin, H, W = x_nchw.shape
    Cout = conv_w.shape[0]
    assert H % 2 == 0 and W % 2 == 0, "AvgPool2d(2,2) needs even spatial dims"
    HP, WP, TW = H // 2, W // 2, 2 * W

    vmem_cap = _vmem_capacity_bytes()
    budget = int(0.4 * vmem_cap)                              # per-step working set cap
    vmem_limit = min(int(0.8 * vmem_cap), 100 * 1024 * 1024)  # scoped VMEM limit

    TR = _choose_row_pairs(N, Cin, Cout, H, W, budget)
    S, P = TR * TW, TR * WP

    # NCHW-native: flatten spatial onto the lane axis (free reshape, no transpose).
    x = x_nchw.reshape(N, Cin, H * W).astype(jnp.bfloat16)
    w = conv_w.reshape(Cout, Cin).astype(jnp.bfloat16)

    # Eval-mode BN folded into per-channel scale/shift (applied post-pool in-kernel).
    inv_std = jax.lax.rsqrt(running_var.astype(jnp.float32) + eps)
    scale = (gamma * inv_std).reshape(Cout, 1).astype(jnp.float32)
    shift = (beta - running_mean * gamma * inv_std).reshape(Cout, 1).astype(jnp.float32)

    # Tiny per-row-pair pool matrix: a row pair is stored as 2W consecutive flat
    # positions [row 2t | row 2t+1]; pool[j, cp] = 0.25 iff (j mod W)//2 == cp.
    # (0.25 is exact in bf16.)
    j = jax.lax.broadcasted_iota(jnp.int32, (TW, WP), 0)
    cp = jax.lax.broadcasted_iota(jnp.int32, (TW, WP), 1)
    pool = jnp.where((j % W) // 2 == cp, 0.25, 0.0).astype(jnp.bfloat16)

    out = pl.pallas_call(
        transition_kernel,
        out_shape=jax.ShapeDtypeStruct((N, Cout, HP * WP), jnp.float32),
        grid=(N, HP // TR),
        in_specs=[
            pl.BlockSpec((1, Cin, S), lambda n, h: (n, 0, h)),   # lane-dense x tile
            pl.BlockSpec((Cout, Cin), lambda n, h: (0, 0)),      # conv weight (tiny, resident)
            pl.BlockSpec((TW, WP), lambda n, h: (0, 0)),         # per-row-pair pool matrix
            pl.BlockSpec((Cout, 1), lambda n, h: (0, 0)),        # BN scale
            pl.BlockSpec((Cout, 1), lambda n, h: (0, 0)),        # BN shift
        ],
        out_specs=pl.BlockSpec((1, Cout, P), lambda n, h: (n, 0, h)),   # lane-dense output tile
        compiler_params=pltpu.CompilerParams(
            dimension_semantics=("parallel", "parallel"),
            vmem_limit_bytes=vmem_limit,
        ),
    )(x, w, pool, scale, shift)

    return out.reshape(N, Cout, HP, WP)   # free reshape, output stays NCHW


def _reference(x_nchw, conv_w, gamma, beta, running_mean, running_var, eps=1e-5):
    # Plain-JAX reference of the PyTorch forward (eval-mode BN), PyTorch op order.
    Cout, Cin = conv_w.shape[0], conv_w.shape[1]
    y = jnp.einsum('nchw,oc->nohw', x_nchw, conv_w.reshape(Cout, Cin))
    y = jnp.maximum(y, 0.0)
    inv_std = 1.0 / jnp.sqrt(running_var + eps)
    y = (y - running_mean[None, :, None, None]) * (gamma * inv_std)[None, :, None, None] \
        + beta[None, :, None, None]
    N, C, H, W = y.shape
    return y.reshape(N, C, H // 2, 2, W // 2, 2).mean(axis=(3, 5))


if __name__ == "__main__":
    key = jax.random.PRNGKey(0)
    k_x, k_w, k_g, k_b, k_m, k_v = jax.random.split(key, 6)

    N, Cin, H, W = 2, 4, 16, 16
    Cout = 8

    x = jax.random.normal(k_x, (N, Cin, H, W), dtype=jnp.float32)
    conv_w = jax.random.normal(k_w, (Cout, Cin, 1, 1), dtype=jnp.float32) * 0.1
    gamma = jax.random.normal(k_g, (Cout,), dtype=jnp.float32) * 0.1 + 1.0
    beta = jax.random.normal(k_b, (Cout,), dtype=jnp.float32) * 0.1
    running_mean = jax.random.normal(k_m, (Cout,), dtype=jnp.float32) * 0.1
    running_var = jax.random.uniform(k_v, (Cout,), dtype=jnp.float32, minval=0.5, maxval=1.5)

    out = transition_layer(x, conv_w, gamma, beta, running_mean, running_var)
    out = jax.block_until_ready(out)

    # The kernel intentionally feeds x / conv_w to the MXU in bf16 (and rounds the
    # ReLU output to bf16 for the pool matmul), so compare against a reference
    # computed from bf16-rounded inputs to isolate kernel correctness from the
    # deliberate precision choices.
    x_r = x.astype(jnp.bfloat16).astype(jnp.float32)
    w_r = conv_w.astype(jnp.bfloat16).astype(jnp.float32)
    ref = _reference(x_r, w_r, gamma, beta, running_mean, running_var)

    assert out.shape == (N, Cout, H // 2, W // 2), out.shape
    err = float(jnp.max(jnp.abs(out - ref)))
    assert jnp.allclose(out, ref, atol=1e-2, rtol=1e-2), err

    print("KERNEL_OK")
</pallas_src>

<mosaic_0001>
module attributes {stable_mosaic.version = 11 : i64} {
  func.func @transition_kernel(%arg0: i32, %arg1: i32, %arg2: memref<1x4x256xbf16, #tpu.memory_space<vmem>>, %arg3: memref<8x4xbf16, #tpu.memory_space<vmem>>, %arg4: memref<32x8xbf16, #tpu.memory_space<vmem>>, %arg5: memref<8x1xf32, #tpu.memory_space<vmem>>, %arg6: memref<8x1xf32, #tpu.memory_space<vmem>>, %arg7: memref<1x8x64xf32, #tpu.memory_space<vmem>>) attributes {dimension_semantics = [#tpu.dimension_semantics<parallel>, #tpu.dimension_semantics<parallel>], iteration_bounds = array<i64: 2, 1>, scalar_prefetch = 0 : i64, scratch_operands = 0 : i64, tpu.core_type = #tpu.core_type<tc>, window_params = [{transform_indices = @transform_0, window_bounds = array<i64: 1, 4, 256>}, {pipeline_mode = #tpu.pipeline_mode<synchronous>, transform_indices = @transform_1, window_bounds = array<i64: 8, 4>}, {pipeline_mode = #tpu.pipeline_mode<synchronous>, transform_indices = @transform_2, window_bounds = array<i64: 32, 8>}, {pipeline_mode = #tpu.pipeline_mode<synchronous>, transform_indices = @transform_3, window_bounds = array<i64: 8, 1>}, {pipeline_mode = #tpu.pipeline_mode<synchronous>, transform_indices = @transform_4, window_bounds = array<i64: 8, 1>}, {transform_indices = @transform_5, window_bounds = array<i64: 1, 8, 64>}]} {
    %c0 = arith.constant 0 : index
    %c0_0 = arith.constant 0 : index
    %0 = vector.load %arg3[%c0, %c0_0] : memref<8x4xbf16, #tpu.memory_space<vmem>>, vector<8x4xbf16>
    %c0_1 = arith.constant 0 : index
    %c0_2 = arith.constant 0 : index
    %c0_3 = arith.constant 0 : index
    %1 = vector.load %arg2[%c0_1, %c0_2, %c0_3] : memref<1x4x256xbf16, #tpu.memory_space<vmem>>, vector<1x4x256xbf16>
    %2 = vector.shape_cast %1 : vector<1x4x256xbf16> to vector<4x256xbf16>
    %cst = arith.constant dense<0.000000e+00> : vector<8x256xf32>
    %3 = tpu.matmul %0, %2, %cst {dimension_numbers = #tpu.dot_dimension_numbers<[1], [0], [0], [1], [0, 0, 1, 1], [], []>} : vector<8x4xbf16>, vector<4x256xbf16>, vector<8x256xf32> -> vector<8x256xf32>
    %cst_4 = arith.constant 0.000000e+00 : f32
    %4 = vector.broadcast %cst_4 : f32 to vector<8x256xf32>
    %5 = arith.maximumf %3, %4 : vector<8x256xf32>
    %6 = arith.truncf %5 : vector<8x256xf32> to vector<8x256xbf16>
    %c0_5 = arith.constant 0 : index
    %c0_6 = arith.constant 0 : index
    %7 = vector.load %arg4[%c0_5, %c0_6] : memref<32x8xbf16, #tpu.memory_space<vmem>>, vector<32x8xbf16>
    %8 = vector.extract_strided_slice %6 {offsets = [0, 0], sizes = [8, 32], strides = [1, 1]} : vector<8x256xbf16> to vector<8x32xbf16>
    %cst_7 = arith.constant dense<0.000000e+00> : vector<8x8xf32>
    %9 = tpu.matmul %8, %7, %cst_7 {dimension_numbers = #tpu.dot_dimension_numbers<[1], [0], [0], [1], [0, 0, 1, 1], [], []>} : vector<8x32xbf16>, vector<32x8xbf16>, vector<8x8xf32> -> vector<8x8xf32>
    %10 = vector.extract_strided_slice %6 {offsets = [0, 32], sizes = [8, 32], strides = [1, 1]} : vector<8x256xbf16> to vector<8x32xbf16>
    %cst_8 = arith.constant dense<0.000000e+00> : vector<8x8xf32>
    %11 = tpu.matmul %10, %7, %cst_8 {dimension_numbers = #tpu.dot_dimension_numbers<[1], [0], [0], [1], [0, 0, 1, 1], [], []>} : vector<8x32xbf16>, vector<32x8xbf16>, vector<8x8xf32> -> vector<8x8xf32>
    %12 = vector.extract_strided_slice %6 {offsets = [0, 64], sizes = [8, 32], strides = [1, 1]} : vector<8x256xbf16> to vector<8x32xbf16>
    %cst_9 = arith.constant dense<0.000000e+00> : vector<8x8xf32>
    %13 = tpu.matmul %12, %7, %cst_9 {dimension_numbers = #tpu.dot_dimension_numbers<[1], [0], [0], [1], [0, 0, 1, 1], [], []>} : vector<8x32xbf16>, vector<32x8xbf16>, vector<8x8xf32> -> vector<8x8xf32>
    %14 = vector.extract_strided_slice %6 {offsets = [0, 96], sizes = [8, 32], strides = [1, 1]} : vector<8x256xbf16> to vector<8x32xbf16>
    %cst_10 = arith.constant dense<0.000000e+00> : vector<8x8xf32>
    %15 = tpu.matmul %14, %7, %cst_10 {dimension_numbers = #tpu.dot_dimension_numbers<[1], [0], [0], [1], [0, 0, 1, 1], [], []>} : vector<8x32xbf16>, vector<32x8xbf16>, vector<8x8xf32> -> vector<8x8xf32>
    %16 = vector.extract_strided_slice %6 {offsets = [0, 128], sizes = [8, 32], strides = [1, 1]} : vector<8x256xbf16> to vector<8x32xbf16>
    %cst_11 = arith.constant dense<0.000000e+00> : vector<8x8xf32>
    %17 = tpu.matmul %16, %7, %cst_11 {dimension_numbers = #tpu.dot_dimension_numbers<[1], [0], [0], [1], [0, 0, 1, 1], [], []>} : vector<8x32xbf16>, vector<32x8xbf16>, vector<8x8xf32> -> vector<8x8xf32>
    %18 = vector.extract_strided_slice %6 {offsets = [0, 160], sizes = [8, 32], strides = [1, 1]} : vector<8x256xbf16> to vector<8x32xbf16>
    %cst_12 = arith.constant dense<0.000000e+00> : vector<8x8xf32>
    %19 = tpu.matmul %18, %7, %cst_12 {dimension_numbers = #tpu.dot_dimension_numbers<[1], [0], [0], [1], [0, 0, 1, 1], [], []>} : vector<8x32xbf16>, vector<32x8xbf16>, vector<8x8xf32> -> vector<8x8xf32>
    %20 = vector.extract_strided_slice %6 {offsets = [0, 192], sizes = [8, 32], strides = [1, 1]} : vector<8x256xbf16> to vector<8x32xbf16>
    %cst_13 = arith.constant dense<0.000000e+00> : vector<8x8xf32>
    %21 = tpu.matmul %20, %7, %cst_13 {dimension_numbers = #tpu.dot_dimension_numbers<[1], [0], [0], [1], [0, 0, 1, 1], [], []>} : vector<8x32xbf16>, vector<32x8xbf16>, vector<8x8xf32> -> vector<8x8xf32>
    %22 = vector.extract_strided_slice %6 {offsets = [0, 224], sizes = [8, 32], strides = [1, 1]} : vector<8x256xbf16> to vector<8x32xbf16>
    %cst_14 = arith.constant dense<0.000000e+00> : vector<8x8xf32>
    %23 = tpu.matmul %22, %7, %cst_14 {dimension_numbers = #tpu.dot_dimension_numbers<[1], [0], [0], [1], [0, 0, 1, 1], [], []>} : vector<8x32xbf16>, vector<32x8xbf16>, vector<8x8xf32> -> vector<8x8xf32>
    %24 = tpu.concatenate %9, %11, %13, %15, %17, %19, %21, %23 in 1 : vector<8x8xf32>, vector<8x8xf32>, vector<8x8xf32>, vector<8x8xf32>, vector<8x8xf32>, vector<8x8xf32>, vector<8x8xf32>, vector<8x8xf32> -> vector<8x64xf32>
    %c0_15 = arith.constant 0 : index
    %c0_16 = arith.constant 0 : index
    %25 = vector.load %arg5[%c0_15, %c0_16] : memref<8x1xf32, #tpu.memory_space<vmem>>, vector<8x1xf32>
    %26 = vector.broadcast %25 : vector<8x1xf32> to vector<8x64xf32>
    %27 = arith.mulf %24, %26 : vector<8x64xf32>
    %c0_17 = arith.constant 0 : index
    %c0_18 = arith.constant 0 : index
    %28 = vector.load %arg6[%c0_17, %c0_18] : memref<8x1xf32, #tpu.memory_space<vmem>>, vector<8x1xf32>
    %29 = vector.broadcast %28 : vector<8x1xf32> to vector<8x64xf32>
    %30 = arith.addf %27, %29 : vector<8x64xf32>
    %c0_19 = arith.constant 0 : index
    %c0_20 = arith.constant 0 : index
    %c0_21 = arith.constant 0 : index
    %31 = vector.load %arg7[%c0_19, %c0_20, %c0_21] : memref<1x8x64xf32, #tpu.memory_space<vmem>>, vector<1x8x64xf32>
    %32 = vector.shape_cast %31 : vector<1x8x64xf32> to vector<8x64xf32>
    %33 = vector.shape_cast %30 : vector<8x64xf32> to vector<1x8x64xf32>
    tpu.vector_store %arg7[%c0_19, %c0_20, %c0_21], %33 {strides = array<i32>} : memref<1x8x64xf32, #tpu.memory_space<vmem>>, vector<1x8x64xf32>,
    return
  }
  func.func @transform_0(%arg0: i32, %arg1: i32) -> (i32, i32, i32) {
    %c0_i32 = arith.constant 0 : i32
    %c0_i32_0 = arith.constant 0 : i32
    return %arg0, %c0_i32, %arg1 : i32, i32, i32
  }
  func.func @transform_1(%arg0: i32, %arg1: i32) -> (i32, i32) {
    %c0_i32 = arith.constant 0 : i32
    %c0_i32_0 = arith.constant 0 : i32
    %c0_i32_1 = arith.constant 0 : i32
    return %c0_i32, %c0_i32_0 : i32, i32
  }
  func.func @transform_2(%arg0: i32, %arg1: i32) -> (i32, i32) {
    %c0_i32 = arith.constant 0 : i32
    %c0_i32_0 = arith.constant 0 : i32
    %c0_i32_1 = arith.constant 0 : i32
    return %c0_i32, %c0_i32_0 : i32, i32
  }
  func.func @transform_3(%arg0: i32, %arg1: i32) -> (i32, i32) {
    %c0_i32 = arith.constant 0 : i32
    %c0_i32_0 = arith.constant 0 : i32
    %c0_i32_1 = arith.constant 0 : i32
    return %c0_i32, %c0_i32_0 : i32, i32
  }
  func.func @transform_4(%arg0: i32, %arg1: i32) -> (i32, i32) {
    %c0_i32 = arith.constant 0 : i32
    %c0_i32_0 = arith.constant 0 : i32
    %c0_i32_1 = arith.constant 0 : i32
    return %c0_i32, %c0_i32_0 : i32, i32
  }
  func.func @transform_5(%arg0: i32, %arg1: i32) -> (i32, i32, i32) {
    %c0_i32 = arith.constant 0 : i32
    %c0_i32_0 = arith.constant 0 : i32
    return %arg0, %c0_i32, %arg1 : i32, i32, i32
  }
}

</mosaic_0001>

<llo_original>
// kernel: tpu_custom_call.1
$region0: #{tpu_custom_call.1}
  #allocation0 [shape = 'u32[]', space=smem, size = 0x4, offset = 0x4, fixed_abs, tag = 'smem constant byte address 0x4 - core index']
  #allocation1 [shape = 'u32[144,128]{1,0:T(1,128)}', space=vmem, size = 0x12000, scoped, tag = 'internal scratch']
  %s0 = inlined_call_operand.vmem [shape: bf16[2,4,256], index: 0, kind: input, shape index: {}]
  %s1 = inlined_call_operand.vmem [shape: bf16[8,4], index: 1, kind: input, shape index: {}]
  %s2 = inlined_call_operand.vmem [shape: bf16[32,8], index: 2, kind: input, shape index: {}]
  %s3 = inlined_call_operand.vmem [shape: f32[8,1], index: 3, kind: input, shape index: {}]
  %s4 = inlined_call_operand.vmem [shape: f32[8,1], index: 4, kind: input, shape index: {}]
  %s5 = inlined_call_operand.hbm [shape: f32[2,8,64], index: 5, kind: output, shape index: {}]
  %s6 = sld [smem:[#allocation0]]
  $region53: #{tpu_custom_call.1} parent=0
    _
  %s8 = ssub.s32 1, %s6
  %s9 = scalar_select 0, %s8, %s6
  $region1: #{tpu_custom_call.1} parent=0
    #allocation2 [shape = 'u8[8192]{0}', space=vmem, size = 0x2000, scoped, tag = 'output window, operand 0']
    #allocation3 [shape = 's32[2]{0}', space=sflag, size = 0x8, scoped, tag = 'scoped memory for tpu_custom_call.1']
    %10 = vsyncpa [#allocation3], 0
    %s11 = scalar_lea.sflag [#allocation3], 1
    %12 = vsyncpa %s11, 0
    loop: start=0, step=1, limit=4
    $region2: #{tpu_custom_call.1} parent=1 // loop_pre_header
      _
    $region3: #{tpu_custom_call.1} parent=1 // loop_header
      %s14 = sphi 0, %s18
      %p15 = scmp.ge.s32.totalorder %s14, 4
      %s21 = sphi 0, %s33
      %s22 = sphi 0, %s29
      %s23 = sphi 0, %s21
      %s24 = sphi 0, %s22
      %s25 = sphi 0, %s23
      %s26 = sphi 0, %s24
      %s38 = sphi 0, %s40
      %s41 = sphi 0, %s38
      %s42 = sphi 0, %s41
      %s58 = sphi 0, %s42
      %s62 = sphi 0, %s62
      %s64 = sphi 0, %s62
      %s65 = sphi 0, %s64
      %s79 = sphi 0, %s65
      %s83 = sphi 0, %s83
      %s85 = sphi 0, %s83
      %s86 = sphi 0, %s85
      %s100 = sphi 0, %s86
      %s104 = sphi 0, %s104
      %s106 = sphi 0, %s104
      %s107 = sphi 0, %s106
      %s121 = sphi 0, %s107
      %s125 = sphi 0, %s125
      %s127 = sphi 0, %s125
      %s128 = sphi 0, %s127
      %s142 = sphi 0, %s128
      %s150 = sphi 0, %s152
      %s153 = sphi 0, %s150
      %s154 = sphi 0, %s153
      %s170 = sphi 0, %s154
    $region4: #{tpu_custom_call.1} parent=1 // loop_header_branch
      %17 = sbr.rel (%p15) target = $region8
    $region5: #{tpu_custom_call.1} parent=1 // loop_body
      %s19 = ssub.s32 %s14, 1
      %s20 = ssub.s32 %s14, 2
      %s27 = sadd.s32 1, %s22
      %p28 = scmp.ge.s32.totalorder %s27, 1
      %s29 = scalar_select %p28, 0, %s27
      %s30 = sadd.s32 1, %s21
      %s31 = scalar_select %p28, %s30, %s21
      %p32 = scmp.ge.s32.totalorder %s31, 2
      %s33 = scalar_select %p32, 0, %s31
      %s34 = ssub.s32 %s21, %s33
      %s35 = ssub.s32 %s22, %s29
      %s36 = sor.u32 %s34, %s35
      %p37 = scmp.eq.s32.totalorder %s36, 0
      %s39 = sadd.s32 %s38, 1
      %s40 = scalar_select %p37, %s38, %s39
      %p43 = pneg %p37
      %p44 = scmp.eq.s32.totalorder %s14, 1
      %p45 = por %p43, %p44
      %p46 = scmp.ne.s32.totalorder %s38, %s41
      %p47 = scmp.eq.s32.totalorder %s14, 0
      %p48 = por %p46, %p47
      %p49 = scmp.ne.s32.totalorder %s38, %s41
      %p50 = scmp.eq.s32.totalorder %s19, 1
      %p51 = por %p49, %p50
      %p52 = scmp.ne.s32.totalorder %s41, %s42
      %p53 = scmp.eq.s32.totalorder %s19, 0
      %p54 = por %p52, %p53
      %p55 = scmp.ne.s32.totalorder %s41, %s42
      %p56 = scmp.eq.s32.totalorder %s20, 1
      %p57 = por %p55, %p56
      %p59 = scmp.ne.s32.totalorder %s42, %s58
      %p60 = scmp.eq.s32.totalorder %s20, 0
      %p61 = por %p59, %p60
      %s63 = sadd.s32 %s62, 1
      %p66 = scmp.eq.s32.totalorder %s14, 1
      %p67 = scmp.ne.s32.totalorder %s62, %s64
      %p68 = scmp.eq.s32.totalorder %s14, 0
      %p69 = por %p67, %p68
      %p70 = scmp.ne.s32.totalorder %s62, %s64
      %p71 = scmp.eq.s32.totalorder %s19, 1
      %p72 = por %p70, %p71
      %p73 = scmp.ne.s32.totalorder %s64, %s65
      %p74 = scmp.eq.s32.totalorder %s19, 0
      %p75 = por %p73, %p74
      %p76 = scmp.ne.s32.totalorder %s64, %s65
      %p77 = scmp.eq.s32.totalorder %s20, 1
      %p78 = por %p76, %p77
      %p80 = scmp.ne.s32.totalorder %s65, %s79
      %p81 = scmp.eq.s32.totalorder %s20, 0
      %p82 = por %p80, %p81
      %s84 = sadd.s32 %s83, 1
      %p87 = scmp.eq.s32.totalorder %s14, 1
      %p88 = scmp.ne.s32.totalorder %s83, %s85
      %p89 = scmp.eq.s32.totalorder %s14, 0
      %p90 = por %p88, %p89
      %p91 = scmp.ne.s32.totalorder %s83, %s85
      %p92 = scmp.eq.s32.totalorder %s19, 1
      %p93 = por %p91, %p92
      %p94 = scmp.ne.s32.totalorder %s85, %s86
      %p95 = scmp.eq.s32.totalorder %s19, 0
      %p96 = por %p94, %p95
      %p97 = scmp.ne.s32.totalorder %s85, %s86
      %p98 = scmp.eq.s32.totalorder %s20, 1
      %p99 = por %p97, %p98
      %p101 = scmp.ne.s32.totalorder %s86, %s100
      %p102 = scmp.eq.s32.totalorder %s20, 0
      %p103 = por %p101, %p102
      %s105 = sadd.s32 %s104, 1
      %p108 = scmp.eq.s32.totalorder %s14, 1
      %p109 = scmp.ne.s32.totalorder %s104, %s106
      %p110 = scmp.eq.s32.totalorder %s14, 0
      %p111 = por %p109, %p110
      %p112 = scmp.ne.s32.totalorder %s104, %s106
      %p113 = scmp.eq.s32.totalorder %s19, 1
      %p114 = por %p112, %p113
      %p115 = scmp.ne.s32.totalorder %s106, %s107
      %p116 = scmp.eq.s32.totalorder %s19, 0
      %p117 = por %p115, %p116
      %p118 = scmp.ne.s32.totalorder %s106, %s107
      %p119 = scmp.eq.s32.totalorder %s20, 1
      %p120 = por %p118, %p119
      %p122 = scmp.ne.s32.totalorder %s107, %s121
      %p123 = scmp.eq.s32.totalorder %s20, 0
      %p124 = por %p122, %p123
      %s126 = sadd.s32 %s125, 1
      %p129 = scmp.eq.s32.totalorder %s14, 1
      %p130 = scmp.ne.s32.totalorder %s125, %s127
      %p131 = scmp.eq.s32.totalorder %s14, 0
      %p132 = por %p130, %p131
      %p133 = scmp.ne.s32.totalorder %s125, %s127
      %p134 = scmp.eq.s32.totalorder %s19, 1
      %p135 = por %p133, %p134
      %p136 = scmp.ne.s32.totalorder %s127, %s128
      %p137 = scmp.eq.s32.totalorder %s19, 0
      %p138 = por %p136, %p137
      %p139 = scmp.ne.s32.totalorder %s127, %s128
      %p140 = scmp.eq.s32.totalorder %s20, 1
      %p141 = por %p139, %p140
      %p143 = scmp.ne.s32.totalorder %s128, %s142
      %p144 = scmp.eq.s32.totalorder %s20, 0
      %p145 = por %p143, %p144
      %s146 = ssub.s32 %s21, %s33
      %s147 = ssub.s32 %s22, %s29
      %s148 = sor.u32 %s146, %s147
      %p149 = scmp.eq.s32.totalorder %s148, 0
      %s151 = sadd.s32 %s150, 1
      %s152 = scalar_select %p149, %s150, %s151
      %p155 = pneg %p149
      %p156 = scmp.eq.s32.totalorder %s14, 1
      %p157 = por %p155, %p156
      %p158 = scmp.ne.s32.totalorder %s150, %s153
      %p159 = scmp.eq.s32.totalorder %s14, 0
      %p160 = por %p158, %p159
      %p161 = scmp.ne.s32.totalorder %s150, %s153
      %p162 = scmp.eq.s32.totalorder %s19, 1
      %p163 = por %p161, %p162
      %p164 = scmp.ne.s32.totalorder %s153, %s154
      %p165 = scmp.eq.s32.totalorder %s19, 0
      %p166 = por %p164, %p165
      %p167 = scmp.ne.s32.totalorder %s153, %s154
      %p168 = scmp.eq.s32.totalorder %s20, 1
      %p169 = por %p167, %p168
      %p171 = scmp.ne.s32.totalorder %s154, %s170
      %p172 = scmp.eq.s32.totalorder %s20, 0
      %p173 = por %p171, %p172
      %p174 = scmp.le.s32.totalorder 1, %s14
      %p175 = scmp.lt.s32.totalorder %s14, 3
      %p176 = pnand %p174, %p175
      %p177 = pneg %p176
      // Predicated region
      $region9: #{tpu_custom_call.1} parent=5 // pred_check
        _
      $region10: #{tpu_custom_call.1} parent=5 // pred_check_branch
        %179 = sbr.rel (%p176) target = $region12
      $region11: #{tpu_custom_call.1} parent=5 // pred_region
        %s180 = ssub.s32 %s14, 1
        // Predicated region
        $region13: #{tpu_custom_call.1} parent=11 // pred_check
          %p181 = pneg %p75
        $region14: #{tpu_custom_call.1} parent=11 // pred_check_branch
          %183 = sbr.rel (%p181) target = $region16
        $region15: #{tpu_custom_call.1} parent=11 // pred_region
          _
        $region16: #{tpu_custom_call.1} parent=11 // pred_fallthru
          _
        // Predicated region
        $region17: #{tpu_custom_call.1} parent=11 // pred_check
          %p184 = pneg %p96
        $region18: #{tpu_custom_call.1} parent=11 // pred_check_branch
          %186 = sbr.rel (%p184) target = $region20
        $region19: #{tpu_custom_call.1} parent=11 // pred_region
          _
        $region20: #{tpu_custom_call.1} parent=11 // pred_fallthru
          _
        // Predicated region
        $region21: #{tpu_custom_call.1} parent=11 // pred_check
          %p187 = pneg %p117
        $region22: #{tpu_custom_call.1} parent=11 // pred_check_branch
          %189 = sbr.rel (%p187) target = $region24
        $region23: #{tpu_custom_call.1} parent=11 // pred_region
          _
        $region24: #{tpu_custom_call.1} parent=11 // pred_fallthru
          _
        // Predicated region
        $region25: #{tpu_custom_call.1} parent=11 // pred_check
          %p190 = pneg %p138
        $region26: #{tpu_custom_call.1} parent=11 // pred_check_branch
          %192 = sbr.rel (%p190) target = $region28
        $region27: #{tpu_custom_call.1} parent=11 // pred_region
          _
        $region28: #{tpu_custom_call.1} parent=11 // pred_fallthru
          _
      $region12: #{tpu_custom_call.1} parent=5 // pred_fallthru
        _
      %p193 = scmp.lt.s32.totalorder %s14, 2
      // Predicated region
      $region29: #{tpu_custom_call.1} parent=5 // pred_check
        %p194 = pneg %p193
      $region30: #{tpu_custom_call.1} parent=5 // pred_check_branch
        %196 = sbr.rel (%p194) target = $region32
      $region31: #{tpu_custom_call.1} parent=5 // pred_region
        // Predicated region
        $region33: #{tpu_custom_call.1} parent=31 // pred_check
          %p197 = pneg %p48
        $region34: #{tpu_custom_call.1} parent=31 // pred_check_branch
          %199 = sbr.rel (%p197) target = $region36
        $region35: #{tpu_custom_call.1} parent=31 // pred_region
          %s200 = smul.u32 2, %s22
          %p201 = scmp.lt.s32.totalorder %s21, 1
          %s202 = scalar_select %p201, %s21, 1
          %p203 = scmp.lt.s32.totalorder %s200, 1
          %s204 = scalar_select %p203, %s200, 1
          %s205 = smul.addr %s202, 2
          %s206 = sadd.s32 %s204, %s205
          %s207 = smul.addr %s206, 2
          %s208 = scalar_lea.vmem %s0, %s207
          %s209 = smul.u32 2, %s22
        $region36: #{tpu_custom_call.1} parent=31 // pred_fallthru
          _
      $region32: #{tpu_custom_call.1} parent=5 // pred_fallthru
        _
      %p210 = scmp.le.s32.totalorder 1, %s14
      %p211 = scmp.lt.s32.totalorder %s14, 3
      %p212 = pnand %p210, %p211
      %p213 = pneg %p212
      // Predicated region
      $region37: #{tpu_custom_call.1} parent=5 // pred_check
        _
      $region38: #{tpu_custom_call.1} parent=5 // pred_check_branch
        %215 = sbr.rel (%p212) target = $region40
      $region39: #{tpu_custom_call.1} parent=5 // pred_region
        %s216 = ssub.s32 %s14, 1
        %s217 = smul.u32 2, %s24
        %p218 = scmp.lt.s32.totalorder %s23, 1
        %s219 = scalar_select %p218, %s23, 1
        %p220 = scmp.lt.s32.totalorder %s217, 1
        %s221 = scalar_select %p220, %s217, 1
        %s222 = smul.addr %s219, 2
        %s223 = sadd.s32 %s221, %s222
        %s224 = smul.addr %s223, 2
        %s225 = scalar_lea.vmem %s0, %s224
        %p226 = pneg %p54
        %p227 = pneg %p51
        %p228 = pneg %p75
        %p229 = pneg %p72
        %p230 = pneg %p96
        %p231 = pneg %p93
        %p232 = pneg %p117
        %p233 = pneg %p114
        %p234 = pneg %p138
        %p235 = pneg %p135
        %p236 = pneg %p166
        %p237 = pneg %p163
        %s238 = sand.u32 %s153, 1
        %s239 = scalar_lea.sflag [#allocation3], %s238
        %s240 = sand.u32 %s153, 1
        %s241 = smul.addr %s240, 8
        %s242 = scalar_lea.vmem [#allocation2], %s241
        %s243 = smul.u32 2, %s24
        %p244 = scmp.lt.s32.totalorder %s23, 1
        %s245 = scalar_select %p244, %s23, 1
        %p246 = scmp.lt.s32.totalorder %s243, 1
        %s247 = scalar_select %p246, %s243, 1
        %s248 = smul.addr %s245, 2
        %s249 = sadd.s32 %s247, %s248
        %s250 = smul.addr %s249, 2
        %s251 = scalar_lea.vmem %s0, %s250
        %s252 = smul.u32 2, %s24
        %v254 = vld [vmem:[%s1] sm:$0xf]
        %v255 = vld [vmem:[%s251] sm:$0xf]
        %v258 = vunpack.c.l.s4 1983009808
        %v259 = vunpack.c.0.s8 %v258
        %v260 = vlaneseq
        %v261 = vshrl.u32 %v260, 7
        %v262 = vsub.s32 %v259, %v261
        %v263 = vrot.slane %v255, %v262
        %v264 = vcombine.high %v263, %v263
        %vm265 = vcmask 31744
        %v267 = vsel %vm265, %v254, 0
        %vm269 = vcmask 1041408
        %v271 = vsel %vm269, %v263, 0
        %v274 = vsel %vm269, %v264, 0
        %276 = vmatprep.subr.bf16.mxu0 %v274
        %277 = vmatpush1.bf16.msra.mxu0 %v271
        %278 = vmatprep.subr.bf16.mxu0 0
        %279 = vmatpush1.bf16.msra.mxu0 0
        %280 = vmatprep.subr.bf16.mxu0 0
        %281 = vmatpush1.bf16.msra.mxu0 0
        %282 = vmatprep.subr.bf16.mxu0 0
        %283 = vmatpush1.bf16.msra.mxu0 0
        %284 = vmatprep.subr.bf16.mxu0 0
        %285 = vmatpush1.bf16.msra.mxu0 0
        %286 = vmatprep.subr.bf16.mxu0 0
        %287 = vmatpush1.bf16.msra.mxu0 0
        %288 = vmatprep.subr.bf16.mxu0 0
        %289 = vmatpush1.bf16.msra.mxu0 0
        %290 = vmatprep.subr.bf16.mxu0 0
        %291 = vmatpush1.bf16.msra.mxu0 0
        %292 = vmatprep.subr.bf16.mxu0 0
        %293 = vmatpush1.bf16.msra.mxu0 0
        %294 = vmatprep.subr.bf16.mxu0 0
        %295 = vmatpush1.bf16.msra.mxu0 0
        %296 = vmatprep.subr.bf16.mxu0 0
        %297 = vmatpush1.bf16.msra.mxu0 0
        %298 = vmatprep.subr.bf16.mxu0 0
        %299 = vmatpush1.bf16.msra.mxu0 0
        %300 = vmatprep.subr.bf16.mxu0 0
        %301 = vmatpush1.bf16.msra.mxu0 0
        %302 = vmatprep.subr.bf16.mxu0 0
        %303 = vmatpush1.bf16.msra.mxu0 0
        %304 = vmatprep.subr.bf16.mxu0 0
        %305 = vmatpush1.bf16.msra.mxu0 0
        %306 = vmatprep.subr.bf16.mxu0 0
        %307 = vmatpush1.bf16.msra.mxu0 0
        %308 = vmatprep.mubr.bf16.mxu0 0
        %309 = vmatmul.mubr.bf16.gmra.mrb[0].mxu0 %v267
        %v310 = vpop.f32.mrb[0].mxu0
        %v311 = vadd.f32 0.0, %v310
        %v312 = vpop.f32.mrb[0].mxu0
        %v313 = vadd.f32 0.0, %v312
        %v314 = vpop.f32.mrb[0].mxu0
        %v315 = vpop.f32.mrb[0].mxu0
        %316 = vdwg.mxu0
        %v317 = vmax.f32 %v311, 0.0
        %v318 = vmax.f32 %v313, 0.0
        %v319 = vpack.c.bf16 %v317, %v317
        %v320 = vpack.c.bf16 %v318, %v318
        %v321 = vld [vmem:[%s2] sm:$0xf]
        %v322 = vld [vmem:[%s2 + $0x4] sm:$0xf]
        %v323 = vld [vmem:[%s2 + $0x8] sm:$0xf]
        %v324 = vld [vmem:[%s2 + $0xc] sm:$0xf]
        %v329 = vunpack.c.l.b16 %v321
        %v330 = vunpack.c.l.b16 %v322
        %v331 = vunpack.c.l.b16 %v323
        %v332 = vunpack.c.l.b16 %v324
        %v333 = vpack.c.b16 %v330, %v329
        %v334 = vpack.c.b16 %v332, %v331
        %vm337 = vcmask 261120
        %v339 = vsel %vm337, %v319, 0
        %341 = vmatprep.subr.bf16.mxu0 0
        %342 = vmatpush1.bf16.msra.mxu0 %v333
        %343 = vmatprep.subr.bf16.mxu0 0
        %344 = vmatpush1.bf16.msra.mxu0 %v334
        %345 = vmatprep.subr.bf16.mxu0 0
        %346 = vmatpush1.bf16.msra.mxu0 0
        %347 = vmatprep.subr.bf16.mxu0 0
        %348 = vmatpush1.bf16.msra.mxu0 0
        %349 = vmatprep.subr.bf16.mxu0 0
        %350 = vmatpush1.bf16.msra.mxu0 0
        %351 = vmatprep.subr.bf16.mxu0 0
        %352 = vmatpush1.bf16.msra.mxu0 0
        %353 = vmatprep.subr.bf16.mxu0 0
        %354 = vmatpush1.bf16.msra.mxu0 0
        %355 = vmatprep.subr.bf16.mxu0 0
        %356 = vmatpush1.bf16.msra.mxu0 0
        %357 = vmatprep.subr.bf16.mxu0 0
        %358 = vmatpush1.bf16.msra.mxu0 0
        %359 = vmatprep.subr.bf16.mxu0 0
        %360 = vmatpush1.bf16.msra.mxu0 0
        %361 = vmatprep.subr.bf16.mxu0 0
        %362 = vmatpush1.bf16.msra.mxu0 0
        %363 = vmatprep.subr.bf16.mxu0 0
        %364 = vmatpush1.bf16.msra.mxu0 0
        %365 = vmatprep.subr.bf16.mxu0 0
        %366 = vmatpush1.bf16.msra.mxu0 0
        %367 = vmatprep.subr.bf16.mxu0 0
        %368 = vmatpush1.bf16.msra.mxu0 0
        %369 = vmatprep.subr.bf16.mxu0 0
        %370 = vmatpush1.bf16.msra.mxu0 0
        %371 = vmatprep.subr.bf16.mxu0 0
        %372 = vmatpush1.bf16.msra.mxu0 0
        %373 = vmatprep.mubr.bf16.mxu0 0
        %374 = vmatmul.mubr.bf16.gmra.mrb[0].mxu0 %v339
        %v375 = vpop.f32.mrb[0].mxu0
        %v376 = vadd.f32 0.0, %v375
        %v377 = vpop.f32.mrb[0].mxu0
        %v378 = vpop.f32.mrb[0].mxu0
        %v379 = vpop.f32.mrb[0].mxu0
        %380 = vdwg.mxu0
        %382 = vrot.lane.b32.xlu0 %v319, 96
        %v383 = vpop.permute.xlu0 %382
        %v385 = vsel %vm337, %v383, 0
        %387 = vmatprep.subr.bf16.mxu0 0
        %388 = vmatpush1.bf16.msra.mxu0 %v333
        %389 = vmatprep.subr.bf16.mxu0 0
        %390 = vmatpush1.bf16.msra.mxu0 %v334
        %391 = vmatprep.subr.bf16.mxu0 0
        %392 = vmatpush1.bf16.msra.mxu0 0
        %393 = vmatprep.subr.bf16.mxu0 0
        %394 = vmatpush1.bf16.msra.mxu0 0
        %395 = vmatprep.subr.bf16.mxu0 0
        %396 = vmatpush1.bf16.msra.mxu0 0
        %397 = vmatprep.subr.bf16.mxu0 0
        %398 = vmatpush1.bf16.msra.mxu0 0
        %399 = vmatprep.subr.bf16.mxu0 0
        %400 = vmatpush1.bf16.msra.mxu0 0
        %401 = vmatprep.subr.bf16.mxu0 0
        %402 = vmatpush1.bf16.msra.mxu0 0
        %403 = vmatprep.subr.bf16.mxu0 0
        %404 = vmatpush1.bf16.msra.mxu0 0
        %405 = vmatprep.subr.bf16.mxu0 0
        %406 = vmatpush1.bf16.msra.mxu0 0
        %407 = vmatprep.subr.bf16.mxu0 0
        %408 = vmatpush1.bf16.msra.mxu0 0
        %409 = vmatprep.subr.bf16.mxu0 0
        %410 = vmatpush1.bf16.msra.mxu0 0
        %411 = vmatprep.subr.bf16.mxu0 0
        %412 = vmatpush1.bf16.msra.mxu0 0
        %413 = vmatprep.subr.bf16.mxu0 0
        %414 = vmatpush1.bf16.msra.mxu0 0
        %415 = vmatprep.subr.bf16.mxu0 0
        %416 = vmatpush1.bf16.msra.mxu0 0
        %417 = vmatprep.subr.bf16.mxu0 0
        %418 = vmatpush1.bf16.msra.mxu0 0
        %419 = vmatprep.mubr.bf16.mxu0 0
        %420 = vmatmul.mubr.bf16.gmra.mrb[0].mxu0 %v385
        %v421 = vpop.f32.mrb[0].mxu0
        %v422 = vadd.f32 0.0, %v421
        %v423 = vpop.f32.mrb[0].mxu0
        %v424 = vpop.f32.mrb[0].mxu0
        %v425 = vpop.f32.mrb[0].mxu0
        %426 = vdwg.mxu0
        %427 = vrot.lane.b32.xlu0 %v319, 64
        %v428 = vpop.permute.xlu0 %427
        %v430 = vsel %vm337, %v428, 0
        %432 = vmatprep.subr.bf16.mxu0 0
        %433 = vmatpush1.bf16.msra.mxu0 %v333
        %434 = vmatprep.subr.bf16.mxu0 0
        %435 = vmatpush1.bf16.msra.mxu0 %v334
        %436 = vmatprep.subr.bf16.mxu0 0
        %437 = vmatpush1.bf16.msra.mxu0 0
        %438 = vmatprep.subr.bf16.mxu0 0
        %439 = vmatpush1.bf16.msra.mxu0 0
        %440 = vmatprep.subr.bf16.mxu0 0
        %441 = vmatpush1.bf16.msra.mxu0 0
        %442 = vmatprep.subr.bf16.mxu0 0
        %443 = vmatpush1.bf16.msra.mxu0 0
        %444 = vmatprep.subr.bf16.mxu0 0
        %445 = vmatpush1.bf16.msra.mxu0 0
        %446 = vmatprep.subr.bf16.mxu0 0
        %447 = vmatpush1.bf16.msra.mxu0 0
        %448 = vmatprep.subr.bf16.mxu0 0
        %449 = vmatpush1.bf16.msra.mxu0 0
        %450 = vmatprep.subr.bf16.mxu0 0
        %451 = vmatpush1.bf16.msra.mxu0 0
        %452 = vmatprep.subr.bf16.mxu0 0
        %453 = vmatpush1.bf16.msra.mxu0 0
        %454 = vmatprep.subr.bf16.mxu0 0
        %455 = vmatpush1.bf16.msra.mxu0 0
        %456 = vmatprep.subr.bf16.mxu0 0
        %457 = vmatpush1.bf16.msra.mxu0 0
        %458 = vmatprep.subr.bf16.mxu0 0
        %459 = vmatpush1.bf16.msra.mxu0 0
        %460 = vmatprep.subr.bf16.mxu0 0
        %461 = vmatpush1.bf16.msra.mxu0 0
        %462 = vmatprep.subr.bf16.mxu0 0
        %463 = vmatpush1.bf16.msra.mxu0 0
        %464 = vmatprep.mubr.bf16.mxu0 0
        %465 = vmatmul.mubr.bf16.gmra.mrb[0].mxu0 %v430
        %v466 = vpop.f32.mrb[0].mxu0
        %v467 = vadd.f32 0.0, %v466
        %v468 = vpop.f32.mrb[0].mxu0
        %v469 = vpop.f32.mrb[0].mxu0
        %v470 = vpop.f32.mrb[0].mxu0
        %471 = vdwg.mxu0
        %472 = vrot.lane.b32.xlu0 %v319, 32
        %v473 = vpop.permute.xlu0 %472
        %v475 = vsel %vm337, %v473, 0
        %477 = vmatprep.subr.bf16.mxu0 0
        %478 = vmatpush1.bf16.msra.mxu0 %v333
        %479 = vmatprep.subr.bf16.mxu0 0
        %480 = vmatpush1.bf16.msra.mxu0 %v334
        %481 = vmatprep.subr.bf16.mxu0 0
        %482 = vmatpush1.bf16.msra.mxu0 0
        %483 = vmatprep.subr.bf16.mxu0 0
        %484 = vmatpush1.bf16.msra.mxu0 0
        %485 = vmatprep.subr.bf16.mxu0 0
        %486 = vmatpush1.bf16.msra.mxu0 0
        %487 = vmatprep.subr.bf16.mxu0 0
        %488 = vmatpush1.bf16.msra.mxu0 0
        %489 = vmatprep.subr.bf16.mxu0 0
        %490 = vmatpush1.bf16.msra.mxu0 0
        %491 = vmatprep.subr.bf16.mxu0 0
        %492 = vmatpush1.bf16.msra.mxu0 0
        %493 = vmatprep.subr.bf16.mxu0 0
        %494 = vmatpush1.bf16.msra.mxu0 0
        %495 = vmatprep.subr.bf16.mxu0 0
        %496 = vmatpush1.bf16.msra.mxu0 0
        %497 = vmatprep.subr.bf16.mxu0 0
        %498 = vmatpush1.bf16.msra.mxu0 0
        %499 = vmatprep.subr.bf16.mxu0 0
        %500 = vmatpush1.bf16.msra.mxu0 0
        %501 = vmatprep.subr.bf16.mxu0 0
        %502 = vmatpush1.bf16.msra.mxu0 0
        %503 = vmatprep.subr.bf16.mxu0 0
        %504 = vmatpush1.bf16.msra.mxu0 0
        %505 = vmatprep.subr.bf16.mxu0 0
        %506 = vmatpush1.bf16.msra.mxu0 0
        %507 = vmatprep.subr.bf16.mxu0 0
        %508 = vmatpush1.bf16.msra.mxu0 0
        %509 = vmatprep.mubr.bf16.mxu0 0
        %510 = vmatmul.mubr.bf16.gmra.mrb[0].mxu0 %v475
        %v511 = vpop.f32.mrb[0].mxu0
        %v512 = vadd.f32 0.0, %v511
        %v513 = vpop.f32.mrb[0].mxu0
        %v514 = vpop.f32.mrb[0].mxu0
        %v515 = vpop.f32.mrb[0].mxu0
        %516 = vdwg.mxu0
        %v518 = vsel %vm337, %v320, 0
        %520 = vmatprep.subr.bf16.mxu0 0
        %521 = vmatpush1.bf16.msra.mxu0 %v333
        %522 = vmatprep.subr.bf16.mxu0 0
        %523 = vmatpush1.bf16.msra.mxu0 %v334
        %524 = vmatprep.subr.bf16.mxu0 0
        %525 = vmatpush1.bf16.msra.mxu0 0
        %526 = vmatprep.subr.bf16.mxu0 0
        %527 = vmatpush1.bf16.msra.mxu0 0
        %528 = vmatprep.subr.bf16.mxu0 0
        %529 = vmatpush1.bf16.msra.mxu0 0
        %530 = vmatprep.subr.bf16.mxu0 0
        %531 = vmatpush1.bf16.msra.mxu0 0
        %532 = vmatprep.subr.bf16.mxu0 0
        %533 = vmatpush1.bf16.msra.mxu0 0
        %534 = vmatprep.subr.bf16.mxu0 0
        %535 = vmatpush1.bf16.msra.mxu0 0
        %536 = vmatprep.subr.bf16.mxu0 0
        %537 = vmatpush1.bf16.msra.mxu0 0
        %538 = vmatprep.subr.bf16.mxu0 0
        %539 = vmatpush1.bf16.msra.mxu0 0
        %540 = vmatprep.subr.bf16.mxu0 0
        %541 = vmatpush1.bf16.msra.mxu0 0
        %542 = vmatprep.subr.bf16.mxu0 0
        %543 = vmatpush1.bf16.msra.mxu0 0
        %544 = vmatprep.subr.bf16.mxu0 0
        %545 = vmatpush1.bf16.msra.mxu0 0
        %546 = vmatprep.subr.bf16.mxu0 0
        %547 = vmatpush1.bf16.msra.mxu0 0
        %548 = vmatprep.subr.bf16.mxu0 0
        %549 = vmatpush1.bf16.msra.mxu0 0
        %550 = vmatprep.subr.bf16.mxu0 0
        %551 = vmatpush1.bf16.msra.mxu0 0
        %552 = vmatprep.mubr.bf16.mxu0 0
        %553 = vmatmul.mubr.bf16.gmra.mrb[0].mxu0 %v518
        %v554 = vpop.f32.mrb[0].mxu0
        %v555 = vadd.f32 0.0, %v554
        %v556 = vpop.f32.mrb[0].mxu0
        %v557 = vpop.f32.mrb[0].mxu0
        %v558 = vpop.f32.mrb[0].mxu0
        %559 = vdwg.mxu0
        %561 = vrot.lane.b32.xlu0 %v320, 96
        %v562 = vpop.permute.xlu0 %561
        %v564 = vsel %vm337, %v562, 0
        %566 = vmatprep.subr.bf16.mxu0 0
        %567 = vmatpush1.bf16.msra.mxu0 %v333
        %568 = vmatprep.subr.bf16.mxu0 0
        %569 = vmatpush1.bf16.msra.mxu0 %v334
        %570 = vmatprep.subr.bf16.mxu0 0
        %571 = vmatpush1.bf16.msra.mxu0 0
        %572 = vmatprep.subr.bf16.mxu0 0
        %573 = vmatpush1.bf16.msra.mxu0 0
        %574 = vmatprep.subr.bf16.mxu0 0
        %575 = vmatpush1.bf16.msra.mxu0 0
        %576 = vmatprep.subr.bf16.mxu0 0
        %577 = vmatpush1.bf16.msra.mxu0 0
        %578 = vmatprep.subr.bf16.mxu0 0
        %579 = vmatpush1.bf16.msra.mxu0 0
        %580 = vmatprep.subr.bf16.mxu0 0
        %581 = vmatpush1.bf16.msra.mxu0 0
        %582 = vmatprep.subr.bf16.mxu0 0
        %583 = vmatpush1.bf16.msra.mxu0 0
        %584 = vmatprep.subr.bf16.mxu0 0
        %585 = vmatpush1.bf16.msra.mxu0 0
        %586 = vmatprep.subr.bf16.mxu0 0
        %587 = vmatpush1.bf16.msra.mxu0 0
        %588 = vmatprep.subr.bf16.mxu0 0
        %589 = vmatpush1.bf16.msra.mxu0 0
        %590 = vmatprep.subr.bf16.mxu0 0
        %591 = vmatpush1.bf16.msra.mxu0 0
        %592 = vmatprep.subr.bf16.mxu0 0
        %593 = vmatpush1.bf16.msra.mxu0 0
        %594 = vmatprep.subr.bf16.mxu0 0
        %595 = vmatpush1.bf16.msra.mxu0 0
        %596 = vmatprep.subr.bf16.mxu0 0
        %597 = vmatpush1.bf16.msra.mxu0 0
        %598 = vmatprep.mubr.bf16.mxu0 0
        %599 = vmatmul.mubr.bf16.gmra.mrb[0].mxu0 %v564
        %v600 = vpop.f32.mrb[0].mxu0
        %v601 = vadd.f32 0.0, %v600
        %v602 = vpop.f32.mrb[0].mxu0
        %v603 = vpop.f32.mrb[0].mxu0
        %v604 = vpop.f32.mrb[0].mxu0
        %605 = vdwg.mxu0
        %606 = vrot.lane.b32.xlu0 %v320, 64
        %v607 = vpop.permute.xlu0 %606
        %v609 = vsel %vm337, %v607, 0
        %611 = vmatprep.subr.bf16.mxu0 0
        %612 = vmatpush1.bf16.msra.mxu0 %v333
        %613 = vmatprep.subr.bf16.mxu0 0
        %614 = vmatpush1.bf16.msra.mxu0 %v334
        %615 = vmatprep.subr.bf16.mxu0 0
        %616 = vmatpush1.bf16.msra.mxu0 0
        %617 = vmatprep.subr.bf16.mxu0 0
        %618 = vmatpush1.bf16.msra.mxu0 0
        %619 = vmatprep.subr.bf16.mxu0 0
        %620 = vmatpush1.bf16.msra.mxu0 0
        %621 = vmatprep.subr.bf16.mxu0 0
        %622 = vmatpush1.bf16.msra.mxu0 0
        %623 = vmatprep.subr.bf16.mxu0 0
        %624 = vmatpush1.bf16.msra.mxu0 0
        %625 = vmatprep.subr.bf16.mxu0 0
        %626 = vmatpush1.bf16.msra.mxu0 0
        %627 = vmatprep.subr.bf16.mxu0 0
        %628 = vmatpush1.bf16.msra.mxu0 0
        %629 = vmatprep.subr.bf16.mxu0 0
        %630 = vmatpush1.bf16.msra.mxu0 0
        %631 = vmatprep.subr.bf16.mxu0 0
        %632 = vmatpush1.bf16.msra.mxu0 0
        %633 = vmatprep.subr.bf16.mxu0 0
        %634 = vmatpush1.bf16.msra.mxu0 0
        %635 = vmatprep.subr.bf16.mxu0 0
        %636 = vmatpush1.bf16.msra.mxu0 0
        %637 = vmatprep.subr.bf16.mxu0 0
        %638 = vmatpush1.bf16.msra.mxu0 0
        %639 = vmatprep.subr.bf16.mxu0 0
        %640 = vmatpush1.bf16.msra.mxu0 0
        %641 = vmatprep.subr.bf16.mxu0 0
        %642 = vmatpush1.bf16.msra.mxu0 0
        %643 = vmatprep.mubr.bf16.mxu0 0
        %644 = vmatmul.mubr.bf16.gmra.mrb[0].mxu0 %v609
        %v645 = vpop.f32.mrb[0].mxu0
        %v646 = vadd.f32 0.0, %v645
        %v647 = vpop.f32.mrb[0].mxu0
        %v648 = vpop.f32.mrb[0].mxu0
        %v649 = vpop.f32.mrb[0].mxu0
        %650 = vdwg.mxu0
        %651 = vrot.lane.b32.xlu0 %v320, 32
        %v652 = vpop.permute.xlu0 %651
        %v654 = vsel %vm337, %v652, 0
        %656 = vmatprep.subr.bf16.mxu0 0
        %657 = vmatpush1.bf16.msra.mxu0 %v333
        %658 = vmatprep.subr.bf16.mxu0 0
        %659 = vmatpush1.bf16.msra.mxu0 %v334
        %660 = vmatprep.subr.bf16.mxu0 0
        %661 = vmatpush1.bf16.msra.mxu0 0
        %662 = vmatprep.subr.bf16.mxu0 0
        %663 = vmatpush1.bf16.msra.mxu0 0
        %664 = vmatprep.subr.bf16.mxu0 0
        %665 = vmatpush1.bf16.msra.mxu0 0
        %666 = vmatprep.subr.bf16.mxu0 0
        %667 = vmatpush1.bf16.msra.mxu0 0
        %668 = vmatprep.subr.bf16.mxu0 0
        %669 = vmatpush1.bf16.msra.mxu0 0
        %670 = vmatprep.subr.bf16.mxu0 0
        %671 = vmatpush1.bf16.msra.mxu0 0
        %672 = vmatprep.subr.bf16.mxu0 0
        %673 = vmatpush1.bf16.msra.mxu0 0
        %674 = vmatprep.subr.bf16.mxu0 0
        %675 = vmatpush1.bf16.msra.mxu0 0
        %676 = vmatprep.subr.bf16.mxu0 0
        %677 = vmatpush1.bf16.msra.mxu0 0
        %678 = vmatprep.subr.bf16.mxu0 0
        %679 = vmatpush1.bf16.msra.mxu0 0
        %680 = vmatprep.subr.bf16.mxu0 0
        %681 = vmatpush1.bf16.msra.mxu0 0
        %682 = vmatprep.subr.bf16.mxu0 0
        %683 = vmatpush1.bf16.msra.mxu0 0
        %684 = vmatprep.subr.bf16.mxu0 0
        %685 = vmatpush1.bf16.msra.mxu0 0
        %686 = vmatprep.subr.bf16.mxu0 0
        %687 = vmatpush1.bf16.msra.mxu0 0
        %688 = vmatprep.mubr.bf16.mxu0 0
        %689 = vmatmul.mubr.bf16.gmra.mrb[0].mxu0 %v654
        %v690 = vpop.f32.mrb[0].mxu0
        %v691 = vadd.f32 0.0, %v690
        %v692 = vpop.f32.mrb[0].mxu0
        %v693 = vpop.f32.mrb[0].mxu0
        %v694 = vpop.f32.mrb[0].mxu0
        %695 = vdwg.mxu0
        %697 = vrot.lane.b32.xlu0 %v422, 8
        %v698 = vpop.permute.xlu0 %697
        %701 = vrot.lane.b32.xlu0 %v467, 16
        %v702 = vpop.permute.xlu0 %701
        %705 = vrot.lane.b32.xlu0 %v512, 24
        %v706 = vpop.permute.xlu0 %705
        %709 = vrot.lane.b32.xlu0 %v555, 32
        %v710 = vpop.permute.xlu0 %709
        %713 = vrot.lane.b32.xlu0 %v601, 40
        %v714 = vpop.permute.xlu0 %713
        %717 = vrot.lane.b32.xlu0 %v646, 48
        %v718 = vpop.permute.xlu0 %717
        %721 = vrot.lane.b32.xlu0 %v691, 56
        %v722 = vpop.permute.xlu0 %721
        %vm724 = vcmask 64512
        %v725 = vsel %vm724, %v376, %v698
        %vm726 = vcmask 130048
        %v727 = vsel %vm726, %v725, %v702
        %vm728 = vcmask 195584
        %v729 = vsel %vm728, %v727, %v706
        %v730 = vsel %vm337, %v729, %v710
        %vm731 = vcmask 326656
        %v732 = vsel %vm731, %v730, %v714
        %vm733 = vcmask 392192
        %v734 = vsel %vm733, %v732, %v718
        %vm735 = vcmask 457728
        %v736 = vsel %vm735, %v734, %v722
        %v737 = vld [vmem:[%s3] sm:$0xff]
        %739 = vset.pattern.permute.xlu0 0
        %740 = vperm.xlu0 %739, %v737
        %v741 = vpop.permute.xlu0 %740
        %v743 = vmul.f32 %v736, %v741
        %v744 = vld [vmem:[%s4] sm:$0xff]
        %746 = vset.pattern.permute.xlu0 0
        %747 = vperm.xlu0 %746, %v744
        %v748 = vpop.permute.xlu0 %747
        %v750 = vadd.f32 %v743, %v748
        %vm751 = vcmask 523264
        %752 = vst.msk [vmem:[%s242] sm:$0xff] %vm751, %v750
        %s753 = sand.u32 %s153, 1
        %s754 = scalar_lea.sflag [#allocation3], %s753
        %s755 = sand.u32 %s153, 1
        %s756 = smul.addr %s755, 8
        %s757 = scalar_lea.vmem [#allocation2], %s756
        // Predicated region
        $region41: #{tpu_custom_call.1} parent=39 // pred_check
          %p758 = pneg %p163
        $region42: #{tpu_custom_call.1} parent=39 // pred_check_branch
          %760 = sbr.rel (%p758) target = $region44
        $region43: #{tpu_custom_call.1} parent=39 // pred_region
          %s762 = ssub.s32 128, 128
          %763 = vsyncadd %s754, %s762
          %s764 = sadd.s32 %s24, %s23
          %s765 = smul.addr %s764, 128
          %s766 = scalar_lea.hbm %s5, %s765
          %s768 = sshll.u32 %s757, 4
          %s769 = int_to_ptr.vmem [resolvable:$true] %s768
          %771 = dma.vmem_to_hbm [thread:$0]  %s769, 128, %s766, %s754
        $region44: #{tpu_custom_call.1} parent=39 // pred_fallthru
          _
      $region40: #{tpu_custom_call.1} parent=5 // pred_fallthru
        _
      %p772 = scmp.le.s32.totalorder 2, %s14
      // Predicated region
      $region45: #{tpu_custom_call.1} parent=5 // pred_check
        %p773 = pneg %p772
      $region46: #{tpu_custom_call.1} parent=5 // pred_check_branch
        %775 = sbr.rel (%p773) target = $region48
      $region47: #{tpu_custom_call.1} parent=5 // pred_region
        %s776 = ssub.s32 %s14, 2
        // Predicated region
        $region49: #{tpu_custom_call.1} parent=47 // pred_check
          %p777 = pneg %p169
        $region50: #{tpu_custom_call.1} parent=47 // pred_check_branch
          %779 = sbr.rel (%p777) target = $region52
        $region51: #{tpu_custom_call.1} parent=47 // pred_region
          %s780 = sand.u32 %s154, 1
          %s781 = scalar_lea.sflag [#allocation3], %s780
          %s782 = sand.u32 %s154, 1
          %s783 = smul.addr %s782, 8
          %s784 = scalar_lea.vmem [#allocation2], %s783
          %785 = dma.done %s781, 128
        $region52: #{tpu_custom_call.1} parent=47 // pred_fallthru
          _
      $region48: #{tpu_custom_call.1} parent=5 // pred_fallthru
        _
    $region6: #{tpu_custom_call.1} parent=1 // loop_footer
      %s18 = sadd.s32 1, %s14
    $region7: #{tpu_custom_call.1} parent=1 // loop_footer_branch
      %13 = sbr.rel target = $region3
    $region8: #{tpu_custom_call.1} parent=1 // loop_exit
      _
    %786 = vsyncpa [#allocation3], 1
    %s787 = scalar_lea.sflag [#allocation3], 1
    %788 = vsyncpa %s787, 1

</llo_original>
